<compile_context>
chip_gen: v5e
topology: v5e:2x2
jax: 0.10.0
libtpu: 0.0.40
codegen_flags: <defaults>
</compile_context>

<pallas_src>
import functools

import numpy as np
import jax
import jax.numpy as jnp
from jax import lax
from jax.experimental import pallas as pl
from jax.experimental.pallas import tpu as pltpu


def _res_cna_kernel(x_ref, masks_ref, *args,
                    W, NL, C, k, n_layers, apply_relu, compute_dtype):
    """Whole ResCNA for one lane-folded batch block, fully fused.

    x_ref:     (1, C, NL)    NL = batch_block*H*W; images concatenated on lanes
    masks_ref: (k*k, 1, NL)  per-tap 0/1 zero-padding masks (float32)
    args:      w_0, b_0, ..., w_{L-1}, b_{L-1}, o_ref
               w_i: (C, k*k*C) fused im2col weight (compute_dtype)
               b_i: (C, 1) float32
    """
    o_ref = args[-1]
    wb_refs = args[:-1]
    r = (k - 1) // 2

    x_f32 = x_ref[0].astype(jnp.float32)              # (C, NL)

    h = x_f32
    for layer in range(n_layers):
        w_ref = wb_refs[2 * layer]                     # (C, k*k*C) bf16
        b_ref = wb_refs[2 * layer + 1]                 # (C, 1) f32

        # Build the im2col operand: for each tap, a lane-rolled (C, NL) slab
        # with out-of-image reads zeroed (masks implement zero 'SAME' padding
        # and isolate lane-folded images from each other).  All elementwise
        # work stays in f32 (native VALU on v5e/v6e/v7x); rolls use the XLU.
        taps = []
        for dy in range(k):
            for dx in range(k):
                t = dy * k + dx
                oy, ox = dy - r, dx - r
                d = oy * W + ox                        # flat read offset
                # shifted[p] = h[(p + d) mod NL]
                shifted = h if d == 0 else pltpu.roll(h, (-d) % NL, axis=1)
                if oy != 0 or ox != 0:
                    shifted = shifted * masks_ref[t]   # (1, NL) broadcast
                taps.append(shifted)
        # 8-row f32 pieces at multiples of 8 -> tile-aligned sublane concat.
        im2col = jnp.concatenate(taps, axis=0)         # (k*k*C, NL) f32

        # One MXU matmul per layer: (C, 72) x (72, NL), bf16 operands,
        # f32 accumulation.  Single hoisted cast instead of 9 per-tap casts.
        conv = jnp.dot(w_ref[...], im2col.astype(compute_dtype),
                       preferred_element_type=jnp.float32)   # (C, NL)
        acc = conv + b_ref[...]                        # bias broadcast (f32)
        if layer < n_layers - 1 and apply_relu:        # inner BlockCNA act
            acc = jnp.maximum(acc, 0.0)
        h = acc                                        # stays resident in vregs

    out = x_f32 + h                                    # residual add
    if apply_relu:                                     # final ResCNA activation
        out = jnp.maximum(out, 0.0)
    o_ref[0] = out.astype(o_ref.dtype)                 # lane-dense unmasked vst


def _num_tensorcores_per_chip():
    """v7x has 2 TensorCores per chip; v5e/v6e have 1.  Safe fallback: 1."""
    try:
        kind = jax.devices()[0].device_kind.lower()
    except Exception:
        return 1
    return 2 if "v7" in kind else 1


def _pick_batch_block(B, N, max_lanes=16384):
    """How many images to fold into the lane axis per grid step.

    Single-TC chips (v5e/v6e): fold everything (grid collapses to 1 step).
    v7x: keep >= 2 grid steps so both TensorCores get work.
    Cap the folded lane width so the f32 im2col slab stays small vs VMEM.
    """
    n_tc = _num_tensorcores_per_chip()
    blk = max(1, B // n_tc)
    blk = min(blk, max(1, max_lanes // N))
    while B % blk:                                    # keep B divisible
        blk -= 1
    return blk


def res_cna_forward(x_nchw, params, *, kernel_size, pad_type='zero',
                    act_type='relu', compute_dtype=jnp.bfloat16,
                    batch_block=None):
    """ResCNA.forward: act(x + Sequential(BlockCNA..., BlockCNA_noact)(x))."""
    if pad_type != 'zero':
        # TODO(synk): reflection/replication padding not implemented in-kernel.
        raise NotImplementedError("only pad_type='zero' is supported")
    if act_type not in ('relu', 'none'):
        # TODO(synk): sigmoid/tanh/lrelu/rrelu/gelu/elu not implemented.
        raise NotImplementedError("only act_type in ('relu','none') supported")
    # TODO(synk): norm_type other than 'none' (batch/instance/layer/group) is
    # not implemented; the module default norm_type='none' is what we fuse.

    B, C, H, W = x_nchw.shape
    k = kernel_size
    assert k % 2 == 1, "residual same-padding requires odd kernel_size"
    N = H * W
    n_layers = len(params)
    KK = k * k * C

    if batch_block is None:
        batch_block = _pick_batch_block(B, N)
    assert B % batch_block == 0
    gB = B // batch_block
    NL = batch_block * N

    # (B, C, H, W) -> (gB, C, batch_block*N): images within a block are
    # concatenated along the lane axis.  When batch_block == 1 this is a free
    # view; otherwise it's a tiny XLA relayout outside the kernel.
    x_fold = (x_nchw.reshape(gB, batch_block, C, N)
                    .transpose(0, 2, 1, 3)
                    .reshape(gB, C, NL))

    # Per-tap 0/1 masks implementing zero padding, computed once on host and
    # tiled across the lane-folded images.  Kept in f32 (native VALU everywhere).
    r = (k - 1) // 2
    yy, xx = np.meshgrid(np.arange(H), np.arange(W), indexing='ij')
    masks_np = np.ones((k * k, 1, N), np.float32)
    for dy in range(k):
        for dx in range(k):
            oy, ox = dy - r, dx - r
            valid = ((yy + oy >= 0) & (yy + oy < H) &
                     (xx + ox >= 0) & (xx + ox < W))
            masks_np[dy * k + dx, 0, :] = valid.reshape(N).astype(np.float32)
    masks = jnp.asarray(np.tile(masks_np, (1, 1, batch_block)))   # (k*k,1,NL)

    inputs = [x_fold, masks]
    in_specs = [
        pl.BlockSpec((1, C, NL), lambda b: (b, 0, 0)),
        pl.BlockSpec((k * k, 1, NL), lambda b: (0, 0, 0)),
    ]
    for (w, bias) in params:
        # (Cout, Cin, kh, kw) -> (Cout, kh*kw*Cin), row order matching the
        # im2col stacking (tap-major, channel-minor); pre-cast once to bf16.
        w_fused = jnp.transpose(w, (0, 2, 3, 1)).reshape(C, KK)
        inputs += [w_fused.astype(compute_dtype),
                   bias.reshape(C, 1).astype(jnp.float32)]
        in_specs += [pl.BlockSpec((C, KK), lambda b: (0, 0)),
                     pl.BlockSpec((C, 1), lambda b: (0, 0))]

    kernel = functools.partial(
        _res_cna_kernel, W=W, NL=NL, C=C, k=k, n_layers=n_layers,
        apply_relu=(act_type == 'relu'), compute_dtype=compute_dtype)

    out_fold = pl.pallas_call(
        kernel,
        out_shape=jax.ShapeDtypeStruct((gB, C, NL), x_nchw.dtype),
        grid_spec=pltpu.PrefetchScalarGridSpec(
            num_scalar_prefetch=0,
            grid=(gB,),                          # 1 step (v5e/v6e) / 2 (v7x)
            in_specs=in_specs,
            out_specs=pl.BlockSpec((1, C, NL), lambda b: (b, 0, 0)),
        ),
        compiler_params=pltpu.CompilerParams(
            dimension_semantics=("parallel",)),
    )(*inputs)

    # Undo the lane fold (free view when batch_block == 1).
    return (out_fold.reshape(gB, C, batch_block, N)
                    .transpose(0, 2, 1, 3)
                    .reshape(B, C, H, W))


# ----------------------------- references ----------------------------------

def res_cna_reference(x, params, *, act_type='relu'):
    """Pure-f32 reference mirroring the PyTorch forward (NCHW / OIHW)."""
    def act(v):
        return jnp.maximum(v, 0.0) if act_type == 'relu' else v
    h = x
    n = len(params)
    for i, (w, b) in enumerate(params):
        h = lax.conv_general_dilated(
            h, w, window_strides=(1, 1), padding='SAME',
            dimension_numbers=('NCHW', 'OIHW', 'NCHW')) + b.reshape(1, -1, 1, 1)
        if i < n - 1:
            h = act(h)
    return act(x + h)


def res_cna_reference_matched(x, params, *, act_type='relu',
                              compute_dtype=jnp.bfloat16):
    """Reference with the same operand precision as the kernel (bf16 matmul
    inputs, f32 accumulation, f32 bias/residual/activation)."""
    def act(v):
        return jnp.maximum(v, 0.0) if act_type == 'relu' else v
    h = x.astype(jnp.float32)
    n = len(params)
    for i, (w, b) in enumerate(params):
        conv = lax.conv_general_dilated(
            h.astype(compute_dtype), w.astype(compute_dtype),
            window_strides=(1, 1), padding='SAME',
            dimension_numbers=('NCHW', 'OIHW', 'NCHW'),
            preferred_element_type=jnp.float32)
        h = conv + b.reshape(1, -1, 1, 1)
        if i < n - 1:
            h = act(h)
    return act(x.astype(jnp.float32) + h)


def make_params(key, mid_nc, kernel_size, num_multiple):
    """Deterministic conv params (OIHW weights + bias), PyTorch-style init."""
    params = []
    fan_in = mid_nc * kernel_size * kernel_size
    bound = 1.0 / (fan_in ** 0.5)
    for _ in range(num_multiple):
        key, kw_, kb_ = jax.random.split(key, 3)
        w = jax.random.uniform(kw_, (mid_nc, mid_nc, kernel_size, kernel_size),
                               jnp.float32, minval=-bound, maxval=bound)
        b = jax.random.uniform(kb_, (mid_nc,), jnp.float32,
                               minval=-bound, maxval=bound)
        params.append((w, b))
    return params


if __name__ == "__main__":
    B, C, H, W = 2, 8, 16, 16          # PyTorch input NCHW: (2, 8, 16, 16)
    kernel_size = 3
    num_multiple = 2                   # conv+relu block, then conv block

    key = jax.random.PRNGKey(0)
    key, kx = jax.random.split(key)
    x = jax.random.normal(kx, (B, C, H, W), jnp.float32)
    params = make_params(key, C, kernel_size, num_multiple)

    fwd = jax.jit(functools.partial(
        res_cna_forward, kernel_size=kernel_size, pad_type='zero',
        act_type='relu', compute_dtype=jnp.bfloat16))
    out = jax.block_until_ready(fwd(x, params))
    assert out.shape == (B, C, H, W)

    # Tight check against a reference with matched operand precision.
    ref_matched = res_cna_reference_matched(x, params, act_type='relu',
                                            compute_dtype=jnp.bfloat16)
    err_m = float(jnp.max(jnp.abs(out - ref_matched)))
    assert jnp.allclose(out, ref_matched, atol=2e-3, rtol=2e-3), err_m

    # Loose check against the pure-f32 module semantics (bf16 MXU operands
    # introduce ~1e-3..1e-2 absolute error at these magnitudes).
    ref_f32 = res_cna_reference(x, params, act_type='relu')
    err_f = float(jnp.max(jnp.abs(out - ref_f32)))
    assert jnp.allclose(out, ref_f32, atol=5e-2, rtol=5e-2), err_f

    print("KERNEL_OK")
</pallas_src>

<mosaic_0001>
module attributes {stable_mosaic.version = 11 : i64} {
  func.func @_res_cna_kernel(%arg0: i32, %arg1: memref<1x8x512xf32, #tpu.memory_space<vmem>>, %arg2: memref<9x1x512xf32, #tpu.memory_space<vmem>>, %arg3: memref<8x72xbf16, #tpu.memory_space<vmem>>, %arg4: memref<8x1xf32, #tpu.memory_space<vmem>>, %arg5: memref<8x72xbf16, #tpu.memory_space<vmem>>, %arg6: memref<8x1xf32, #tpu.memory_space<vmem>>, %arg7: memref<1x8x512xf32, #tpu.memory_space<vmem>>) attributes {dimension_semantics = [#tpu.dimension_semantics<parallel>], iteration_bounds = array<i64: 1>, scalar_prefetch = 0 : i64, scratch_operands = 0 : i64, tpu.core_type = #tpu.core_type<tc>, window_params = [{transform_indices = @transform_0, window_bounds = array<i64: 1, 8, 512>}, {pipeline_mode = #tpu.pipeline_mode<synchronous>, transform_indices = @transform_1, window_bounds = array<i64: 9, 1, 512>}, {pipeline_mode = #tpu.pipeline_mode<synchronous>, transform_indices = @transform_2, window_bounds = array<i64: 8, 72>}, {pipeline_mode = #tpu.pipeline_mode<synchronous>, transform_indices = @transform_3, window_bounds = array<i64: 8, 1>}, {pipeline_mode = #tpu.pipeline_mode<synchronous>, transform_indices = @transform_4, window_bounds = array<i64: 8, 72>}, {pipeline_mode = #tpu.pipeline_mode<synchronous>, transform_indices = @transform_5, window_bounds = array<i64: 8, 1>}, {transform_indices = @transform_6, window_bounds = array<i64: 1, 8, 512>}]} {
    %c0 = arith.constant 0 : index
    %c0_0 = arith.constant 0 : index
    %c0_1 = arith.constant 0 : index
    %0 = vector.load %arg1[%c0, %c0_0, %c0_1] : memref<1x8x512xf32, #tpu.memory_space<vmem>>, vector<1x8x512xf32>
    %1 = vector.shape_cast %0 : vector<1x8x512xf32> to vector<8x512xf32>
    %c17_i32 = arith.constant 17 : i32
    %2 = tpu.dynamic_rotate %1 by %c17_i32 dim 1 : vector<8x512xf32>, i32 -> vector<8x512xf32>
    %c0_2 = arith.constant 0 : index
    %c0_3 = arith.constant 0 : index
    %c0_4 = arith.constant 0 : index
    %3 = vector.load %arg2[%c0_2, %c0_3, %c0_4] : memref<9x1x512xf32, #tpu.memory_space<vmem>>, vector<1x1x512xf32>
    %4 = vector.shape_cast %3 : vector<1x1x512xf32> to vector<1x512xf32>
    %5 = vector.broadcast %4 : vector<1x512xf32> to vector<8x512xf32>
    %6 = arith.mulf %2, %5 : vector<8x512xf32>
    %c16_i32 = arith.constant 16 : i32
    %7 = tpu.dynamic_rotate %1 by %c16_i32 dim 1 : vector<8x512xf32>, i32 -> vector<8x512xf32>
    %c1 = arith.constant 1 : index
    %c0_5 = arith.constant 0 : index
    %c0_6 = arith.constant 0 : index
    %8 = vector.load %arg2[%c1, %c0_5, %c0_6] : memref<9x1x512xf32, #tpu.memory_space<vmem>>, vector<1x1x512xf32>
    %9 = vector.shape_cast %8 : vector<1x1x512xf32> to vector<1x512xf32>
    %10 = vector.broadcast %9 : vector<1x512xf32> to vector<8x512xf32>
    %11 = arith.mulf %7, %10 : vector<8x512xf32>
    %c15_i32 = arith.constant 15 : i32
    %12 = tpu.dynamic_rotate %1 by %c15_i32 dim 1 : vector<8x512xf32>, i32 -> vector<8x512xf32>
    %c2 = arith.constant 2 : index
    %c0_7 = arith.constant 0 : index
    %c0_8 = arith.constant 0 : index
    %13 = vector.load %arg2[%c2, %c0_7, %c0_8] : memref<9x1x512xf32, #tpu.memory_space<vmem>>, vector<1x1x512xf32>
    %14 = vector.shape_cast %13 : vector<1x1x512xf32> to vector<1x512xf32>
    %15 = vector.broadcast %14 : vector<1x512xf32> to vector<8x512xf32>
    %16 = arith.mulf %12, %15 : vector<8x512xf32>
    %c1_i32 = arith.constant 1 : i32
    %17 = tpu.dynamic_rotate %1 by %c1_i32 dim 1 : vector<8x512xf32>, i32 -> vector<8x512xf32>
    %c3 = arith.constant 3 : index
    %c0_9 = arith.constant 0 : index
    %c0_10 = arith.constant 0 : index
    %18 = vector.load %arg2[%c3, %c0_9, %c0_10] : memref<9x1x512xf32, #tpu.memory_space<vmem>>, vector<1x1x512xf32>
    %19 = vector.shape_cast %18 : vector<1x1x512xf32> to vector<1x512xf32>
    %20 = vector.broadcast %19 : vector<1x512xf32> to vector<8x512xf32>
    %21 = arith.mulf %17, %20 : vector<8x512xf32>
    %c511_i32 = arith.constant 511 : i32
    %22 = tpu.dynamic_rotate %1 by %c511_i32 dim 1 : vector<8x512xf32>, i32 -> vector<8x512xf32>
    %c5 = arith.constant 5 : index
    %c0_11 = arith.constant 0 : index
    %c0_12 = arith.constant 0 : index
    %23 = vector.load %arg2[%c5, %c0_11, %c0_12] : memref<9x1x512xf32, #tpu.memory_space<vmem>>, vector<1x1x512xf32>
    %24 = vector.shape_cast %23 : vector<1x1x512xf32> to vector<1x512xf32>
    %25 = vector.broadcast %24 : vector<1x512xf32> to vector<8x512xf32>
    %26 = arith.mulf %22, %25 : vector<8x512xf32>
    %c497_i32 = arith.constant 497 : i32
    %27 = tpu.dynamic_rotate %1 by %c497_i32 dim 1 : vector<8x512xf32>, i32 -> vector<8x512xf32>
    %c6 = arith.constant 6 : index
    %c0_13 = arith.constant 0 : index
    %c0_14 = arith.constant 0 : index
    %28 = vector.load %arg2[%c6, %c0_13, %c0_14] : memref<9x1x512xf32, #tpu.memory_space<vmem>>, vector<1x1x512xf32>
    %29 = vector.shape_cast %28 : vector<1x1x512xf32> to vector<1x512xf32>
    %30 = vector.broadcast %29 : vector<1x512xf32> to vector<8x512xf32>
    %31 = arith.mulf %27, %30 : vector<8x512xf32>
    %c496_i32 = arith.constant 496 : i32
    %32 = tpu.dynamic_rotate %1 by %c496_i32 dim 1 : vector<8x512xf32>, i32 -> vector<8x512xf32>
    %c7 = arith.constant 7 : index
    %c0_15 = arith.constant 0 : index
    %c0_16 = arith.constant 0 : index
    %33 = vector.load %arg2[%c7, %c0_15, %c0_16] : memref<9x1x512xf32, #tpu.memory_space<vmem>>, vector<1x1x512xf32>
    %34 = vector.shape_cast %33 : vector<1x1x512xf32> to vector<1x512xf32>
    %35 = vector.broadcast %34 : vector<1x512xf32> to vector<8x512xf32>
    %36 = arith.mulf %32, %35 : vector<8x512xf32>
    %c495_i32 = arith.constant 495 : i32
    %37 = tpu.dynamic_rotate %1 by %c495_i32 dim 1 : vector<8x512xf32>, i32 -> vector<8x512xf32>
    %c8 = arith.constant 8 : index
    %c0_17 = arith.constant 0 : index
    %c0_18 = arith.constant 0 : index
    %38 = vector.load %arg2[%c8, %c0_17, %c0_18] : memref<9x1x512xf32, #tpu.memory_space<vmem>>, vector<1x1x512xf32>
    %39 = vector.shape_cast %38 : vector<1x1x512xf32> to vector<1x512xf32>
    %40 = vector.broadcast %39 : vector<1x512xf32> to vector<8x512xf32>
    %41 = arith.mulf %37, %40 : vector<8x512xf32>
    %42 = tpu.concatenate %6, %11, %16, %21, %1, %26, %31, %36, %41 in 0 : vector<8x512xf32>, vector<8x512xf32>, vector<8x512xf32>, vector<8x512xf32>, vector<8x512xf32>, vector<8x512xf32>, vector<8x512xf32>, vector<8x512xf32>, vector<8x512xf32> -> vector<72x512xf32>
    %c0_19 = arith.constant 0 : index
    %c0_20 = arith.constant 0 : index
    %43 = vector.load %arg3[%c0_19, %c0_20] : memref<8x72xbf16, #tpu.memory_space<vmem>>, vector<8x72xbf16>
    %44 = arith.truncf %42 : vector<72x512xf32> to vector<72x512xbf16>
    %cst = arith.constant dense<0.000000e+00> : vector<8x512xf32>
    %45 = tpu.matmul %43, %44, %cst {dimension_numbers = #tpu.dot_dimension_numbers<[1], [0], [0], [1], [0, 0, 1, 1], [], []>} : vector<8x72xbf16>, vector<72x512xbf16>, vector<8x512xf32> -> vector<8x512xf32>
    %c0_21 = arith.constant 0 : index
    %c0_22 = arith.constant 0 : index
    %46 = vector.load %arg4[%c0_21, %c0_22] : memref<8x1xf32, #tpu.memory_space<vmem>>, vector<8x1xf32>
    %47 = vector.broadcast %46 : vector<8x1xf32> to vector<8x512xf32>
    %48 = arith.addf %45, %47 : vector<8x512xf32>
    %cst_23 = arith.constant 0.000000e+00 : f32
    %49 = vector.broadcast %cst_23 : f32 to vector<8x512xf32>
    %50 = arith.maximumf %48, %49 : vector<8x512xf32>
    %c17_i32_24 = arith.constant 17 : i32
    %51 = tpu.dynamic_rotate %50 by %c17_i32_24 dim 1 : vector<8x512xf32>, i32 -> vector<8x512xf32>
    %c0_25 = arith.constant 0 : index
    %c0_26 = arith.constant 0 : index
    %c0_27 = arith.constant 0 : index
    %52 = vector.load %arg2[%c0_25, %c0_26, %c0_27] : memref<9x1x512xf32, #tpu.memory_space<vmem>>, vector<1x1x512xf32>
    %53 = vector.shape_cast %52 : vector<1x1x512xf32> to vector<1x512xf32>
    %54 = vector.broadcast %53 : vector<1x512xf32> to vector<8x512xf32>
    %55 = arith.mulf %51, %54 : vector<8x512xf32>
    %c16_i32_28 = arith.constant 16 : i32
    %56 = tpu.dynamic_rotate %50 by %c16_i32_28 dim 1 : vector<8x512xf32>, i32 -> vector<8x512xf32>
    %c1_29 = arith.constant 1 : index
    %c0_30 = arith.constant 0 : index
    %c0_31 = arith.constant 0 : index
    %57 = vector.load %arg2[%c1_29, %c0_30, %c0_31] : memref<9x1x512xf32, #tpu.memory_space<vmem>>, vector<1x1x512xf32>
    %58 = vector.shape_cast %57 : vector<1x1x512xf32> to vector<1x512xf32>
    %59 = vector.broadcast %58 : vector<1x512xf32> to vector<8x512xf32>
    %60 = arith.mulf %56, %59 : vector<8x512xf32>
    %c15_i32_32 = arith.constant 15 : i32
    %61 = tpu.dynamic_rotate %50 by %c15_i32_32 dim 1 : vector<8x512xf32>, i32 -> vector<8x512xf32>
    %c2_33 = arith.constant 2 : index
    %c0_34 = arith.constant 0 : index
    %c0_35 = arith.constant 0 : index
    %62 = vector.load %arg2[%c2_33, %c0_34, %c0_35] : memref<9x1x512xf32, #tpu.memory_space<vmem>>, vector<1x1x512xf32>
    %63 = vector.shape_cast %62 : vector<1x1x512xf32> to vector<1x512xf32>
    %64 = vector.broadcast %63 : vector<1x512xf32> to vector<8x512xf32>
    %65 = arith.mulf %61, %64 : vector<8x512xf32>
    %c1_i32_36 = arith.constant 1 : i32
    %66 = tpu.dynamic_rotate %50 by %c1_i32_36 dim 1 : vector<8x512xf32>, i32 -> vector<8x512xf32>
    %c3_37 = arith.constant 3 : index
    %c0_38 = arith.constant 0 : index
    %c0_39 = arith.constant 0 : index
    %67 = vector.load %arg2[%c3_37, %c0_38, %c0_39] : memref<9x1x512xf32, #tpu.memory_space<vmem>>, vector<1x1x512xf32>
    %68 = vector.shape_cast %67 : vector<1x1x512xf32> to vector<1x512xf32>
    %69 = vector.broadcast %68 : vector<1x512xf32> to vector<8x512xf32>
    %70 = arith.mulf %66, %69 : vector<8x512xf32>
    %c511_i32_40 = arith.constant 511 : i32
    %71 = tpu.dynamic_rotate %50 by %c511_i32_40 dim 1 : vector<8x512xf32>, i32 -> vector<8x512xf32>
    %c5_41 = arith.constant 5 : index
    %c0_42 = arith.constant 0 : index
    %c0_43 = arith.constant 0 : index
    %72 = vector.load %arg2[%c5_41, %c0_42, %c0_43] : memref<9x1x512xf32, #tpu.memory_space<vmem>>, vector<1x1x512xf32>
    %73 = vector.shape_cast %72 : vector<1x1x512xf32> to vector<1x512xf32>
    %74 = vector.broadcast %73 : vector<1x512xf32> to vector<8x512xf32>
    %75 = arith.mulf %71, %74 : vector<8x512xf32>
    %c497_i32_44 = arith.constant 497 : i32
    %76 = tpu.dynamic_rotate %50 by %c497_i32_44 dim 1 : vector<8x512xf32>, i32 -> vector<8x512xf32>
    %c6_45 = arith.constant 6 : index
    %c0_46 = arith.constant 0 : index
    %c0_47 = arith.constant 0 : index
    %77 = vector.load %arg2[%c6_45, %c0_46, %c0_47] : memref<9x1x512xf32, #tpu.memory_space<vmem>>, vector<1x1x512xf32>
    %78 = vector.shape_cast %77 : vector<1x1x512xf32> to vector<1x512xf32>
    %79 = vector.broadcast %78 : vector<1x512xf32> to vector<8x512xf32>
    %80 = arith.mulf %76, %79 : vector<8x512xf32>
    %c496_i32_48 = arith.constant 496 : i32
    %81 = tpu.dynamic_rotate %50 by %c496_i32_48 dim 1 : vector<8x512xf32>, i32 -> vector<8x512xf32>
    %c7_49 = arith.constant 7 : index
    %c0_50 = arith.constant 0 : index
    %c0_51 = arith.constant 0 : index
    %82 = vector.load %arg2[%c7_49, %c0_50, %c0_51] : memref<9x1x512xf32, #tpu.memory_space<vmem>>, vector<1x1x512xf32>
    %83 = vector.shape_cast %82 : vector<1x1x512xf32> to vector<1x512xf32>
    %84 = vector.broadcast %83 : vector<1x512xf32> to vector<8x512xf32>
    %85 = arith.mulf %81, %84 : vector<8x512xf32>
    %c495_i32_52 = arith.constant 495 : i32
    %86 = tpu.dynamic_rotate %50 by %c495_i32_52 dim 1 : vector<8x512xf32>, i32 -> vector<8x512xf32>
    %c8_53 = arith.constant 8 : index
    %c0_54 = arith.constant 0 : index
    %c0_55 = arith.constant 0 : index
    %87 = vector.load %arg2[%c8_53, %c0_54, %c0_55] : memref<9x1x512xf32, #tpu.memory_space<vmem>>, vector<1x1x512xf32>
    %88 = vector.shape_cast %87 : vector<1x1x512xf32> to vector<1x512xf32>
    %89 = vector.broadcast %88 : vector<1x512xf32> to vector<8x512xf32>
    %90 = arith.mulf %86, %89 : vector<8x512xf32>
    %91 = tpu.concatenate %55, %60, %65, %70, %50, %75, %80, %85, %90 in 0 : vector<8x512xf32>, vector<8x512xf32>, vector<8x512xf32>, vector<8x512xf32>, vector<8x512xf32>, vector<8x512xf32>, vector<8x512xf32>, vector<8x512xf32>, vector<8x512xf32> -> vector<72x512xf32>
    %c0_56 = arith.constant 0 : index
    %c0_57 = arith.constant 0 : index
    %92 = vector.load %arg5[%c0_56, %c0_57] : memref<8x72xbf16, #tpu.memory_space<vmem>>, vector<8x72xbf16>
    %93 = arith.truncf %91 : vector<72x512xf32> to vector<72x512xbf16>
    %cst_58 = arith.constant dense<0.000000e+00> : vector<8x512xf32>
    %94 = tpu.matmul %92, %93, %cst_58 {dimension_numbers = #tpu.dot_dimension_numbers<[1], [0], [0], [1], [0, 0, 1, 1], [], []>} : vector<8x72xbf16>, vector<72x512xbf16>, vector<8x512xf32> -> vector<8x512xf32>
    %c0_59 = arith.constant 0 : index
    %c0_60 = arith.constant 0 : index
    %95 = vector.load %arg6[%c0_59, %c0_60] : memref<8x1xf32, #tpu.memory_space<vmem>>, vector<8x1xf32>
    %96 = vector.broadcast %95 : vector<8x1xf32> to vector<8x512xf32>
    %97 = arith.addf %94, %96 : vector<8x512xf32>
    %98 = arith.addf %1, %97 : vector<8x512xf32>
    %cst_61 = arith.constant 0.000000e+00 : f32
    %99 = vector.broadcast %cst_61 : f32 to vector<8x512xf32>
    %100 = arith.maximumf %98, %99 : vector<8x512xf32>
    %c0_62 = arith.constant 0 : index
    %c0_63 = arith.constant 0 : index
    %c0_64 = arith.constant 0 : index
    %101 = vector.load %arg7[%c0_62, %c0_63, %c0_64] : memref<1x8x512xf32, #tpu.memory_space<vmem>>, vector<1x8x512xf32>
    %102 = vector.shape_cast %101 : vector<1x8x512xf32> to vector<8x512xf32>
    %103 = vector.shape_cast %100 : vector<8x512xf32> to vector<1x8x512xf32>
    tpu.vector_store %arg7[%c0_62, %c0_63, %c0_64], %103 {strides = array<i32>} : memref<1x8x512xf32, #tpu.memory_space<vmem>>, vector<1x8x512xf32>,
    return
  }
  func.func @transform_0(%arg0: i32) -> (i32, i32, i32) {
    %c0_i32 = arith.constant 0 : i32
    %c0_i32_0 = arith.constant 0 : i32
    %c0_i32_1 = arith.constant 0 : i32
    return %arg0, %c0_i32, %c0_i32_0 : i32, i32, i32
  }
  func.func @transform_1(%arg0: i32) -> (i32, i32, i32) {
    %c0_i32 = arith.constant 0 : i32
    %c0_i32_0 = arith.constant 0 : i32
    %c0_i32_1 = arith.constant 0 : i32
    %c0_i32_2 = arith.constant 0 : i32
    return %c0_i32, %c0_i32_0, %c0_i32_1 : i32, i32, i32
  }
  func.func @transform_2(%arg0: i32) -> (i32, i32) {
    %c0_i32 = arith.constant 0 : i32
    %c0_i32_0 = arith.constant 0 : i32
    %c0_i32_1 = arith.constant 0 : i32
    return %c0_i32, %c0_i32_0 : i32, i32
  }
  func.func @transform_3(%arg0: i32) -> (i32, i32) {
    %c0_i32 = arith.constant 0 : i32
    %c0_i32_0 = arith.constant 0 : i32
    %c0_i32_1 = arith.constant 0 : i32
    return %c0_i32, %c0_i32_0 : i32, i32
  }
  func.func @transform_4(%arg0: i32) -> (i32, i32) {
    %c0_i32 = arith.constant 0 : i32
    %c0_i32_0 = arith.constant 0 : i32
    %c0_i32_1 = arith.constant 0 : i32
    return %c0_i32, %c0_i32_0 : i32, i32
  }
  func.func @transform_5(%arg0: i32) -> (i32, i32) {
    %c0_i32 = arith.constant 0 : i32
    %c0_i32_0 = arith.constant 0 : i32
    %c0_i32_1 = arith.constant 0 : i32
    return %c0_i32, %c0_i32_0 : i32, i32
  }
  func.func @transform_6(%arg0: i32) -> (i32, i32, i32) {
    %c0_i32 = arith.constant 0 : i32
    %c0_i32_0 = arith.constant 0 : i32
    %c0_i32_1 = arith.constant 0 : i32
    return %arg0, %c0_i32, %c0_i32_0 : i32, i32, i32
  }
}

</mosaic_0001>

<llo_original>
// kernel: res_cna_forward.1
$region0: #{res_cna_forward.1}
  #allocation0 [shape = 'u32[]', space=smem, size = 0x4, offset = 0x4, fixed_abs, tag = 'smem constant byte address 0x4 - core index']
  #allocation1 [shape = 'u32[72,128]{1,0:T(1,128)}', space=vmem, size = 0x9000, scoped, tag = 'internal scratch']
  %s0 = inlined_call_operand.vmem [shape: f32[1,8,512], index: 0, kind: input, shape index: {}]
  %s1 = inlined_call_operand.vmem [shape: f32[9,1,512], index: 1, kind: input, shape index: {}]
  %s2 = inlined_call_operand.vmem [shape: bf16[8,72], index: 2, kind: input, shape index: {}]
  %s3 = inlined_call_operand.vmem [shape: f32[8,1], index: 3, kind: input, shape index: {}]
  %s4 = inlined_call_operand.vmem [shape: bf16[8,72], index: 4, kind: input, shape index: {}]
  %s5 = inlined_call_operand.vmem [shape: f32[8,1], index: 5, kind: input, shape index: {}]
  %s6 = inlined_call_operand.vmem [shape: f32[1,8,512], index: 6, kind: output, shape index: {}]
  %s7 = sld [smem:[#allocation0]]
  $region34: #{res_cna_forward.1} parent=0
    _
  %s9 = ssub.s32 1, %s7
  %s10 = scalar_select 0, %s9, %s7
  // Predicated region
  $region2: #{res_cna_forward.1} parent=0 // pred_check
    _
  $region3: #{res_cna_forward.1} parent=0 // pred_check_branch
    %12 = sbr.rel (0) target = $region5
  $region4: #{res_cna_forward.1} parent=0 // pred_region
    _
  $region5: #{res_cna_forward.1} parent=0 // pred_fallthru
    _
  // Predicated region
  $region6: #{res_cna_forward.1} parent=0 // pred_check
    _
  $region7: #{res_cna_forward.1} parent=0 // pred_check_branch
    %14 = sbr.rel (0) target = $region9
  $region8: #{res_cna_forward.1} parent=0 // pred_region
    _
  $region9: #{res_cna_forward.1} parent=0 // pred_fallthru
    _
  // Predicated region
  $region10: #{res_cna_forward.1} parent=0 // pred_check
    _
  $region11: #{res_cna_forward.1} parent=0 // pred_check_branch
    %16 = sbr.rel (0) target = $region13
  $region12: #{res_cna_forward.1} parent=0 // pred_region
    _
  $region13: #{res_cna_forward.1} parent=0 // pred_fallthru
    _
  // Predicated region
  $region14: #{res_cna_forward.1} parent=0 // pred_check
    _
  $region15: #{res_cna_forward.1} parent=0 // pred_check_branch
    %18 = sbr.rel (0) target = $region17
  $region16: #{res_cna_forward.1} parent=0 // pred_region
    _
  $region17: #{res_cna_forward.1} parent=0 // pred_fallthru
    _
  // Predicated region
  $region18: #{res_cna_forward.1} parent=0 // pred_check
    _
  $region19: #{res_cna_forward.1} parent=0 // pred_check_branch
    %20 = sbr.rel (0) target = $region21
  $region20: #{res_cna_forward.1} parent=0 // pred_region
    _
  $region21: #{res_cna_forward.1} parent=0 // pred_fallthru
    _
  // Predicated region
  $region22: #{res_cna_forward.1} parent=0 // pred_check
    _
  $region23: #{res_cna_forward.1} parent=0 // pred_check_branch
    %22 = sbr.rel (0) target = $region25
  $region24: #{res_cna_forward.1} parent=0 // pred_region
    _
  $region25: #{res_cna_forward.1} parent=0 // pred_fallthru
    _
  %v24 = vld [vmem:[%s0] sm:$0xff]
  %v25 = vld [vmem:[%s0 + $0x8] sm:$0xff]
  %v26 = vld [vmem:[%s0 + $0x10] sm:$0xff]
  %v27 = vld [vmem:[%s0 + $0x18] sm:$0xff]
  %28 = vrot.lane.b32.xlu0 %v24, 17
  %v29 = vpop.permute.xlu0 %28
  %30 = vrot.lane.b32.xlu0 %v25, 17
  %v31 = vpop.permute.xlu0 %30
  %32 = vrot.lane.b32.xlu0 %v26, 17
  %v33 = vpop.permute.xlu0 %32
  %34 = vrot.lane.b32.xlu0 %v27, 17
  %v35 = vpop.permute.xlu0 %34
  %v36 = vlaneseq
  %v37 = vand.u32 %v36, 127
  %vm38 = vcmp.lt.s32.totalorder %v37, 17
  %v39 = vsel %vm38, %v33, %v35
  %v40 = vsel %vm38, %v31, %v33
  %v41 = vsel %vm38, %v29, %v31
  %v42 = vsel %vm38, %v35, %v29
  %v43 = vld [vmem:[%s1] sm:$0xf]
  %v45 = vperm.slane %v43, 0
  %v46 = vperm.slane %v43, 1
  %v47 = vperm.slane %v43, 2
  %v48 = vperm.slane %v43, 3
  %v53 = vmul.f32 %v42, %v45
  %v54 = vmul.f32 %v41, %v46
  %v55 = vmul.f32 %v40, %v47
  %v56 = vmul.f32 %v39, %v48
  %57 = vrot.lane.b32.xlu0 %v24, 16
  %v58 = vpop.permute.xlu0 %57
  %59 = vrot.lane.b32.xlu0 %v25, 16
  %v60 = vpop.permute.xlu0 %59
  %61 = vrot.lane.b32.xlu0 %v26, 16
  %v62 = vpop.permute.xlu0 %61
  %63 = vrot.lane.b32.xlu0 %v27, 16
  %v64 = vpop.permute.xlu0 %63
  %vm65 = vcmp.lt.s32.totalorder %v37, 16
  %v66 = vsel %vm65, %v62, %v64
  %v67 = vsel %vm65, %v60, %v62
  %v68 = vsel %vm65, %v58, %v60
  %v69 = vsel %vm65, %v64, %v58
  %s70 = scalar_lea.vmem %s1, 4
  %v71 = vld [vmem:[%s70] sm:$0xf]
  %v73 = vperm.slane %v71, 0
  %v74 = vperm.slane %v71, 1
  %v75 = vperm.slane %v71, 2
  %v76 = vperm.slane %v71, 3
  %v81 = vmul.f32 %v69, %v73
  %v82 = vmul.f32 %v68, %v74
  %v83 = vmul.f32 %v67, %v75
  %v84 = vmul.f32 %v66, %v76
  %85 = vrot.lane.b32.xlu0 %v24, 15
  %v86 = vpop.permute.xlu0 %85
  %87 = vrot.lane.b32.xlu0 %v25, 15
  %v88 = vpop.permute.xlu0 %87
  %89 = vrot.lane.b32.xlu0 %v26, 15
  %v90 = vpop.permute.xlu0 %89
  %91 = vrot.lane.b32.xlu0 %v27, 15
  %v92 = vpop.permute.xlu0 %91
  %vm93 = vcmp.lt.s32.totalorder %v37, 15
  %v94 = vsel %vm93, %v90, %v92
  %v95 = vsel %vm93, %v88, %v90
  %v96 = vsel %vm93, %v86, %v88
  %v97 = vsel %vm93, %v92, %v86
  %s98 = scalar_lea.vmem %s1, 8
  %v99 = vld [vmem:[%s98] sm:$0xf]
  %v101 = vperm.slane %v99, 0
  %v102 = vperm.slane %v99, 1
  %v103 = vperm.slane %v99, 2
  %v104 = vperm.slane %v99, 3
  %v109 = vmul.f32 %v97, %v101
  %v110 = vmul.f32 %v96, %v102
  %v111 = vmul.f32 %v95, %v103
  %v112 = vmul.f32 %v94, %v104
  %113 = vrot.lane.b32.xlu0 %v24, 1
  %v114 = vpop.permute.xlu0 %113
  %115 = vrot.lane.b32.xlu0 %v25, 1
  %v116 = vpop.permute.xlu0 %115
  %117 = vrot.lane.b32.xlu0 %v26, 1
  %v118 = vpop.permute.xlu0 %117
  %119 = vrot.lane.b32.xlu0 %v27, 1
  %v120 = vpop.permute.xlu0 %119
  %vm121 = vcmp.lt.s32.totalorder %v37, 1
  %v122 = vsel %vm121, %v118, %v120
  %v123 = vsel %vm121, %v116, %v118
  %v124 = vsel %vm121, %v114, %v116
  %v125 = vsel %vm121, %v120, %v114
  %s126 = scalar_lea.vmem %s1, 12
  %v127 = vld [vmem:[%s126] sm:$0xf]
  %v129 = vperm.slane %v127, 0
  %v130 = vperm.slane %v127, 1
  %v131 = vperm.slane %v127, 2
  %v132 = vperm.slane %v127, 3
  %v137 = vmul.f32 %v125, %v129
  %v138 = vmul.f32 %v124, %v130
  %v139 = vmul.f32 %v123, %v131
  %v140 = vmul.f32 %v122, %v132
  %141 = vrot.lane.b32.xlu0 %v24, 127
  %v142 = vpop.permute.xlu0 %141
  %143 = vrot.lane.b32.xlu0 %v25, 127
  %v144 = vpop.permute.xlu0 %143
  %145 = vrot.lane.b32.xlu0 %v26, 127
  %v146 = vpop.permute.xlu0 %145
  %147 = vrot.lane.b32.xlu0 %v27, 127
  %v148 = vpop.permute.xlu0 %147
  %vm149 = vcmp.lt.s32.totalorder %v37, 127
  %v150 = vsel %vm149, %v146, %v148
  %v151 = vsel %vm149, %v144, %v146
  %v152 = vsel %vm149, %v142, %v144
  %v153 = vsel %vm149, %v148, %v142
  %s154 = scalar_lea.vmem %s1, 20
  %v155 = vld [vmem:[%s154] sm:$0xf]
  %v157 = vperm.slane %v155, 0
  %v158 = vperm.slane %v155, 1
  %v159 = vperm.slane %v155, 2
  %v160 = vperm.slane %v155, 3
  %v165 = vmul.f32 %v152, %v157
  %v166 = vmul.f32 %v151, %v158
  %v167 = vmul.f32 %v150, %v159
  %v168 = vmul.f32 %v153, %v160
  %169 = vrot.lane.b32.xlu0 %v24, 113
  %v170 = vpop.permute.xlu0 %169
  %171 = vrot.lane.b32.xlu0 %v25, 113
  %v172 = vpop.permute.xlu0 %171
  %173 = vrot.lane.b32.xlu0 %v26, 113
  %v174 = vpop.permute.xlu0 %173
  %175 = vrot.lane.b32.xlu0 %v27, 113
  %v176 = vpop.permute.xlu0 %175
  %vm177 = vcmp.lt.s32.totalorder %v37, 113
  %v178 = vsel %vm177, %v174, %v176
  %v179 = vsel %vm177, %v172, %v174
  %v180 = vsel %vm177, %v170, %v172
  %v181 = vsel %vm177, %v176, %v170
  %s182 = scalar_lea.vmem %s1, 24
  %v183 = vld [vmem:[%s182] sm:$0xf]
  %v185 = vperm.slane %v183, 0
  %v186 = vperm.slane %v183, 1
  %v187 = vperm.slane %v183, 2
  %v188 = vperm.slane %v183, 3
  %v193 = vmul.f32 %v180, %v185
  %v194 = vmul.f32 %v179, %v186
  %v195 = vmul.f32 %v178, %v187
  %v196 = vmul.f32 %v181, %v188
  %197 = vrot.lane.b32.xlu0 %v24, 112
  %v198 = vpop.permute.xlu0 %197
  %199 = vrot.lane.b32.xlu0 %v25, 112
  %v200 = vpop.permute.xlu0 %199
  %201 = vrot.lane.b32.xlu0 %v26, 112
  %v202 = vpop.permute.xlu0 %201
  %203 = vrot.lane.b32.xlu0 %v27, 112
  %v204 = vpop.permute.xlu0 %203
  %vm205 = vcmp.lt.s32.totalorder %v37, 112
  %v206 = vsel %vm205, %v202, %v204
  %v207 = vsel %vm205, %v200, %v202
  %v208 = vsel %vm205, %v198, %v200
  %v209 = vsel %vm205, %v204, %v198
  %s210 = scalar_lea.vmem %s1, 28
  %v211 = vld [vmem:[%s210] sm:$0xf]
  %v213 = vperm.slane %v211, 0
  %v214 = vperm.slane %v211, 1
  %v215 = vperm.slane %v211, 2
  %v216 = vperm.slane %v211, 3
  %v221 = vmul.f32 %v208, %v213
  %v222 = vmul.f32 %v207, %v214
  %v223 = vmul.f32 %v206, %v215
  %v224 = vmul.f32 %v209, %v216
  %225 = vrot.lane.b32.xlu0 %v24, 111
  %v226 = vpop.permute.xlu0 %225
  %227 = vrot.lane.b32.xlu0 %v25, 111
  %v228 = vpop.permute.xlu0 %227
  %229 = vrot.lane.b32.xlu0 %v26, 111
  %v230 = vpop.permute.xlu0 %229
  %231 = vrot.lane.b32.xlu0 %v27, 111
  %v232 = vpop.permute.xlu0 %231
  %vm233 = vcmp.lt.s32.totalorder %v37, 111
  %v234 = vsel %vm233, %v230, %v232
  %v235 = vsel %vm233, %v228, %v230
  %v236 = vsel %vm233, %v226, %v228
  %v237 = vsel %vm233, %v232, %v226
  %s238 = scalar_lea.vmem %s1, 32
  %v239 = vld [vmem:[%s238] sm:$0xf]
  %v241 = vperm.slane %v239, 0
  %v242 = vperm.slane %v239, 1
  %v243 = vperm.slane %v239, 2
  %v244 = vperm.slane %v239, 3
  %v249 = vmul.f32 %v236, %v241
  %v250 = vmul.f32 %v235, %v242
  %v251 = vmul.f32 %v234, %v243
  %v252 = vmul.f32 %v237, %v244
  %v253 = vld [vmem:[%s2] sm:$0xf]
  %v254 = vpack.c.bf16 %v81, %v53
  %v255 = vpack.c.bf16 %v82, %v54
  %v256 = vpack.c.bf16 %v83, %v55
  %v257 = vpack.c.bf16 %v84, %v56
  %v258 = vpack.c.bf16 %v137, %v109
  %v259 = vpack.c.bf16 %v138, %v110
  %v260 = vpack.c.bf16 %v139, %v111
  %v261 = vpack.c.bf16 %v140, %v112
  %v262 = vpack.c.bf16 %v165, %v24
  %v263 = vpack.c.bf16 %v166, %v25
  %v264 = vpack.c.bf16 %v167, %v26
  %v265 = vpack.c.bf16 %v168, %v27
  %v266 = vpack.c.bf16 %v221, %v193
  %v267 = vpack.c.bf16 %v222, %v194
  %v268 = vpack.c.bf16 %v223, %v195
  %v269 = vpack.c.bf16 %v224, %v196
  %v270 = vpack.c.bf16 %v249, %v249
  %v271 = vpack.c.bf16 %v250, %v250
  %v272 = vpack.c.bf16 %v251, %v251
  %v273 = vpack.c.bf16 %v252, %v252
  %v274 = vld [vmem:[%s3] sm:$0xff]
  %276 = vset.pattern.permute.xlu0 0
  %277 = vperm.xlu0 %276, %v274
  %v278 = vpop.permute.xlu0 %277
  %vm280 = vcmask 588800
  %v282 = vsel %vm280, %v253, 0
  %vm284 = vcmask 1043456
  %v286 = vsel %vm284, %v270, 0
  %v289 = vsel %vm284, %v271, 0
  %v292 = vsel %vm284, %v272, 0
  %v295 = vsel %vm284, %v273, 0
  %297 = vmatpush.bf16.msra.mxu0 0
  %298 = vmatpush.bf16.msra.mxu0 0
  %299 = vmatpush.bf16.msra.mxu0 0
  %300 = vmatpush.bf16.msra.mxu0 %v286
  %301 = vmatpush.bf16.msra.mxu0 %v266
  %302 = vmatpush.bf16.msra.mxu0 %v262
  %303 = vmatpush.bf16.msra.mxu0 %v258
  %304 = vmatpush.bf16.msra.mxu0 %v254
  %305 = vmatmul.bf16.gmra.mxu0 %v282
  %v306 = vpop.f32.mrf.mxu0
  %v307 = vadd.f32 %v278, %v306
  %v308 = vpop.f32.mrf.mxu0
  %309 = vdwg.mxu0
  %310 = vmatpush.bf16.msra.mxu0 0
  %311 = vmatpush.bf16.msra.mxu0 0
  %312 = vmatpush.bf16.msra.mxu0 0
  %313 = vmatpush.bf16.msra.mxu0 %v289
  %314 = vmatpush.bf16.msra.mxu0 %v267
  %315 = vmatpush.bf16.msra.mxu0 %v263
  %316 = vmatpush.bf16.msra.mxu0 %v259
  %317 = vmatpush.bf16.msra.mxu0 %v255
  %318 = vmatmul.bf16.gmra.mxu0 %v282
  %v319 = vpop.f32.mrf.mxu0
  %v320 = vadd.f32 %v278, %v319
  %v321 = vpop.f32.mrf.mxu0
  %322 = vdwg.mxu0
  %323 = vmatpush.bf16.msra.mxu0 0
  %324 = vmatpush.bf16.msra.mxu0 0
  %325 = vmatpush.bf16.msra.mxu0 0
  %326 = vmatpush.bf16.msra.mxu0 %v292
  %327 = vmatpush.bf16.msra.mxu0 %v268
  %328 = vmatpush.bf16.msra.mxu0 %v264
  %329 = vmatpush.bf16.msra.mxu0 %v260
  %330 = vmatpush.bf16.msra.mxu0 %v256
  %331 = vmatmul.bf16.gmra.mxu0 %v282
  %v332 = vpop.f32.mrf.mxu0
  %v333 = vadd.f32 %v278, %v332
  %v334 = vpop.f32.mrf.mxu0
  %335 = vdwg.mxu0
  %336 = vmatpush.bf16.msra.mxu0 0
  %337 = vmatpush.bf16.msra.mxu0 0
  %338 = vmatpush.bf16.msra.mxu0 0
  %339 = vmatpush.bf16.msra.mxu0 %v295
  %340 = vmatpush.bf16.msra.mxu0 %v269
  %341 = vmatpush.bf16.msra.mxu0 %v265
  %342 = vmatpush.bf16.msra.mxu0 %v261
  %343 = vmatpush.bf16.msra.mxu0 %v257
  %344 = vmatmul.bf16.gmra.mxu0 %v282
  %v345 = vpop.f32.mrf.mxu0
  %v346 = vadd.f32 %v278, %v345
  %v347 = vpop.f32.mrf.mxu0
  %348 = vdwg.mxu0
  %v349 = vmax.f32 %v307, 0.0
  %v350 = vmax.f32 %v320, 0.0
  %v351 = vmax.f32 %v333, 0.0
  %v352 = vmax.f32 %v346, 0.0
  %353 = vrot.lane.b32.xlu0 %v349, 17
  %v354 = vpop.permute.xlu0 %353
  %355 = vrot.lane.b32.xlu0 %v350, 17
  %v356 = vpop.permute.xlu0 %355
  %357 = vrot.lane.b32.xlu0 %v351, 17
  %v358 = vpop.permute.xlu0 %357
  %359 = vrot.lane.b32.xlu0 %v352, 17
  %v360 = vpop.permute.xlu0 %359
  %v361 = vsel %vm38, %v358, %v360
  %v362 = vsel %vm38, %v356, %v358
  %v363 = vsel %vm38, %v354, %v356
  %v364 = vsel %vm38, %v360, %v354
  %v365 = vmul.f32 %v364, %v45
  %v366 = vmul.f32 %v363, %v46
  %v367 = vmul.f32 %v362, %v47
  %v368 = vmul.f32 %v361, %v48
  %369 = vrot.lane.b32.xlu0 %v349, 16
  %v370 = vpop.permute.xlu0 %369
  %371 = vrot.lane.b32.xlu0 %v350, 16
  %v372 = vpop.permute.xlu0 %371
  %373 = vrot.lane.b32.xlu0 %v351, 16
  %v374 = vpop.permute.xlu0 %373
  %375 = vrot.lane.b32.xlu0 %v352, 16
  %v376 = vpop.permute.xlu0 %375
  %v377 = vsel %vm65, %v374, %v376
  %v378 = vsel %vm65, %v372, %v374
  %v379 = vsel %vm65, %v370, %v372
  %v380 = vsel %vm65, %v376, %v370
  %v381 = vmul.f32 %v380, %v73
  %v382 = vmul.f32 %v379, %v74
  %v383 = vmul.f32 %v378, %v75
  %v384 = vmul.f32 %v377, %v76
  %385 = vrot.lane.b32.xlu0 %v349, 15
  %v386 = vpop.permute.xlu0 %385
  %387 = vrot.lane.b32.xlu0 %v350, 15
  %v388 = vpop.permute.xlu0 %387
  %389 = vrot.lane.b32.xlu0 %v351, 15
  %v390 = vpop.permute.xlu0 %389
  %391 = vrot.lane.b32.xlu0 %v352, 15
  %v392 = vpop.permute.xlu0 %391
  %v393 = vsel %vm93, %v390, %v392
  %v394 = vsel %vm93, %v388, %v390
  %v395 = vsel %vm93, %v386, %v388
  %v396 = vsel %vm93, %v392, %v386
  %v397 = vmul.f32 %v396, %v101
  %v398 = vmul.f32 %v395, %v102
  %v399 = vmul.f32 %v394, %v103
  %v400 = vmul.f32 %v393, %v104
  %401 = vrot.lane.b32.xlu0 %v349, 1
  %v402 = vpop.permute.xlu0 %401
  %403 = vrot.lane.b32.xlu0 %v350, 1
  %v404 = vpop.permute.xlu0 %403
  %405 = vrot.lane.b32.xlu0 %v351, 1
  %v406 = vpop.permute.xlu0 %405
  %407 = vrot.lane.b32.xlu0 %v352, 1
  %v408 = vpop.permute.xlu0 %407
  %v409 = vsel %vm121, %v406, %v408
  %v410 = vsel %vm121, %v404, %v406
  %v411 = vsel %vm121, %v402, %v404
  %v412 = vsel %vm121, %v408, %v402
  %v413 = vmul.f32 %v412, %v129
  %v414 = vmul.f32 %v411, %v130
  %v415 = vmul.f32 %v410, %v131
  %v416 = vmul.f32 %v409, %v132
  %417 = vrot.lane.b32.xlu0 %v349, 127
  %v418 = vpop.permute.xlu0 %417
  %419 = vrot.lane.b32.xlu0 %v350, 127
  %v420 = vpop.permute.xlu0 %419
  %421 = vrot.lane.b32.xlu0 %v351, 127
  %v422 = vpop.permute.xlu0 %421
  %423 = vrot.lane.b32.xlu0 %v352, 127
  %v424 = vpop.permute.xlu0 %423
  %v425 = vsel %vm149, %v422, %v424
  %v426 = vsel %vm149, %v420, %v422
  %v427 = vsel %vm149, %v418, %v420
  %v428 = vsel %vm149, %v424, %v418
  %v429 = vmul.f32 %v427, %v157
  %v430 = vmul.f32 %v426, %v158
  %v431 = vmul.f32 %v425, %v159
  %v432 = vmul.f32 %v428, %v160
  %433 = vrot.lane.b32.xlu0 %v349, 113
  %v434 = vpop.permute.xlu0 %433
  %435 = vrot.lane.b32.xlu0 %v350, 113
  %v436 = vpop.permute.xlu0 %435
  %437 = vrot.lane.b32.xlu0 %v351, 113
  %v438 = vpop.permute.xlu0 %437
  %439 = vrot.lane.b32.xlu0 %v352, 113
  %v440 = vpop.permute.xlu0 %439
  %v441 = vsel %vm177, %v438, %v440
  %v442 = vsel %vm177, %v436, %v438
  %v443 = vsel %vm177, %v434, %v436
  %v444 = vsel %vm177, %v440, %v434
  %v445 = vmul.f32 %v443, %v185
  %v446 = vmul.f32 %v442, %v186
  %v447 = vmul.f32 %v441, %v187
  %v448 = vmul.f32 %v444, %v188
  %449 = vrot.lane.b32.xlu0 %v349, 112
  %v450 = vpop.permute.xlu0 %449
  %451 = vrot.lane.b32.xlu0 %v350, 112
  %v452 = vpop.permute.xlu0 %451
  %453 = vrot.lane.b32.xlu0 %v351, 112
  %v454 = vpop.permute.xlu0 %453
  %455 = vrot.lane.b32.xlu0 %v352, 112
  %v456 = vpop.permute.xlu0 %455
  %v457 = vsel %vm205, %v454, %v456
  %v458 = vsel %vm205, %v452, %v454
  %v459 = vsel %vm205, %v450, %v452
  %v460 = vsel %vm205, %v456, %v450
  %v461 = vmul.f32 %v459, %v213
  %v462 = vmul.f32 %v458, %v214
  %v463 = vmul.f32 %v457, %v215
  %v464 = vmul.f32 %v460, %v216
  %465 = vrot.lane.b32.xlu0 %v349, 111
  %v466 = vpop.permute.xlu0 %465
  %467 = vrot.lane.b32.xlu0 %v350, 111
  %v468 = vpop.permute.xlu0 %467
  %469 = vrot.lane.b32.xlu0 %v351, 111
  %v470 = vpop.permute.xlu0 %469
  %471 = vrot.lane.b32.xlu0 %v352, 111
  %v472 = vpop.permute.xlu0 %471
  %v473 = vsel %vm233, %v470, %v472
  %v474 = vsel %vm233, %v468, %v470
  %v475 = vsel %vm233, %v466, %v468
  %v476 = vsel %vm233, %v472, %v466
  %v477 = vmul.f32 %v475, %v241
  %v478 = vmul.f32 %v474, %v242
  %v479 = vmul.f32 %v473, %v243
  %v480 = vmul.f32 %v476, %v244
  %v481 = vld [vmem:[%s4] sm:$0xf]
  %v482 = vpack.c.bf16 %v381, %v365
  %v483 = vpack.c.bf16 %v382, %v366
  %v484 = vpack.c.bf16 %v383, %v367
  %v485 = vpack.c.bf16 %v384, %v368
  %v486 = vpack.c.bf16 %v413, %v397
  %v487 = vpack.c.bf16 %v414, %v398
  %v488 = vpack.c.bf16 %v415, %v399
  %v489 = vpack.c.bf16 %v416, %v400
  %v490 = vpack.c.bf16 %v429, %v349
  %v491 = vpack.c.bf16 %v430, %v350
  %v492 = vpack.c.bf16 %v431, %v351
  %v493 = vpack.c.bf16 %v432, %v352
  %v494 = vpack.c.bf16 %v461, %v445
  %v495 = vpack.c.bf16 %v462, %v446
  %v496 = vpack.c.bf16 %v463, %v447
  %v497 = vpack.c.bf16 %v464, %v448
  %v498 = vpack.c.bf16 %v477, %v477
  %v499 = vpack.c.bf16 %v478, %v478
  %v500 = vpack.c.bf16 %v479, %v479
  %v501 = vpack.c.bf16 %v480, %v480
  %v502 = vld [vmem:[%s5] sm:$0xff]
  %504 = vset.pattern.permute.xlu0 0
  %505 = vperm.xlu0 %504, %v502
  %v506 = vpop.permute.xlu0 %505
  %v509 = vsel %vm280, %v481, 0
  %v512 = vsel %vm284, %v498, 0
  %v515 = vsel %vm284, %v499, 0
  %v518 = vsel %vm284, %v500, 0
  %v521 = vsel %vm284, %v501, 0
  %523 = vmatpush.bf16.msra.mxu0 0
  %524 = vmatpush.bf16.msra.mxu0 0
  %525 = vmatpush.bf16.msra.mxu0 0
  %526 = vmatpush.bf16.msra.mxu0 %v512
  %527 = vmatpush.bf16.msra.mxu0 %v494
  %528 = vmatpush.bf16.msra.mxu0 %v490
  %529 = vmatpush.bf16.msra.mxu0 %v486
  %530 = vmatpush.bf16.msra.mxu0 %v482
  %531 = vmatmul.bf16.gmra.mxu0 %v509
  %v532 = vpop.f32.mrf.mxu0
  %v533 = vadd.f32 %v506, %v532
  %v534 = vpop.f32.mrf.mxu0
  %535 = vdwg.mxu0
  %536 = vmatpush.bf16.msra.mxu0 0
  %537 = vmatpush.bf16.msra.mxu0 0
  %538 = vmatpush.bf16.msra.mxu0 0
  %539 = vmatpush.bf16.msra.mxu0 %v515
  %540 = vmatpush.bf16.msra.mxu0 %v495
  %541 = vmatpush.bf16.msra.mxu0 %v491
  %542 = vmatpush.bf16.msra.mxu0 %v487
  %543 = vmatpush.bf16.msra.mxu0 %v483
  %544 = vmatmul.bf16.gmra.mxu0 %v509
  %v545 = vpop.f32.mrf.mxu0
  %v546 = vadd.f32 %v506, %v545
  %v547 = vpop.f32.mrf.mxu0
  %548 = vdwg.mxu0
  %549 = vmatpush.bf16.msra.mxu0 0
  %550 = vmatpush.bf16.msra.mxu0 0
  %551 = vmatpush.bf16.msra.mxu0 0
  %552 = vmatpush.bf16.msra.mxu0 %v518
  %553 = vmatpush.bf16.msra.mxu0 %v496
  %554 = vmatpush.bf16.msra.mxu0 %v492
  %555 = vmatpush.bf16.msra.mxu0 %v488
  %556 = vmatpush.bf16.msra.mxu0 %v484
  %557 = vmatmul.bf16.gmra.mxu0 %v509
  %v558 = vpop.f32.mrf.mxu0
  %v559 = vadd.f32 %v506, %v558
  %v560 = vpop.f32.mrf.mxu0
  %561 = vdwg.mxu0
  %562 = vmatpush.bf16.msra.mxu0 0
  %563 = vmatpush.bf16.msra.mxu0 0
  %564 = vmatpush.bf16.msra.mxu0 0
  %565 = vmatpush.bf16.msra.mxu0 %v521
  %566 = vmatpush.bf16.msra.mxu0 %v497
  %567 = vmatpush.bf16.msra.mxu0 %v493
  %568 = vmatpush.bf16.msra.mxu0 %v489
  %569 = vmatpush.bf16.msra.mxu0 %v485
  %570 = vmatmul.bf16.gmra.mxu0 %v509
  %v571 = vpop.f32.mrf.mxu0
  %v572 = vadd.f32 %v506, %v571
  %v573 = vpop.f32.mrf.mxu0
  %574 = vdwg.mxu0
  %v575 = vadd.f32 %v24, %v533
  %v576 = vadd.f32 %v25, %v546
  %v577 = vadd.f32 %v26, %v559
  %v578 = vadd.f32 %v27, %v572
  %v579 = vmax.f32 %v575, 0.0
  %v580 = vmax.f32 %v576, 0.0
  %v581 = vmax.f32 %v577, 0.0
  %v582 = vmax.f32 %v578, 0.0
  %583 = vst [vmem:[%s6] sm:$0xff] %v579
  %584 = vst [vmem:[%s6 + $0x8] sm:$0xff] %v580
  %585 = vst [vmem:[%s6 + $0x10] sm:$0xff] %v581
  %586 = vst [vmem:[%s6 + $0x18] sm:$0xff] %v582
  // Predicated region
  $region26: #{res_cna_forward.1} parent=0 // pred_check
    _
  $region27: #{res_cna_forward.1} parent=0 // pred_check_branch
    %588 = sbr.rel (0) target = $region29
  $region28: #{res_cna_forward.1} parent=0 // pred_region
    _
  $region29: #{res_cna_forward.1} parent=0 // pred_fallthru
    _
  // Predicated region
  $region30: #{res_cna_forward.1} parent=0 // pred_check
    _
  $region31: #{res_cna_forward.1} parent=0 // pred_check_branch
    %590 = sbr.rel (0) target = $region33
  $region32: #{res_cna_forward.1} parent=0 // pred_region
    _
  $region33: #{res_cna_forward.1} parent=0 // pred_fallthru
    _

</llo_original>
